<compile_context>
chip_gen: v7x
topology: tpu7x:2x2x1
jax: 0.10.0
libtpu: 0.0.40
codegen_flags: <defaults>
</compile_context>

<pallas_src>
import jax
import jax.numpy as jnp
from jax import lax
from jax.experimental import pallas as pl
from jax.experimental.pallas import tpu as pltpu


# --------------------------------------------------------------------------
# VMEM budgeting
# --------------------------------------------------------------------------

def _vmem_limit_bytes():
    """Scoped-VMEM target derived from the chip: <=48 MiB (v5e/v6e), <=32 MiB (v7x)."""
    cap = None
    try:
        cap = getattr(pltpu.get_tpu_info(), "vmem_capacity_bytes", None)
    except Exception:
        cap = None
    if not cap:
        cap = 64 * 1024 * 1024          # conservative default (v7x per-TC VMEM)
    return int(min(cap // 2, 48 * 1024 * 1024))


def _single_pass_fits(s, c, n_q, key_isz, out_isz, budget_bytes):
    """Whole-(C,S)-slab footprint: double-buffered blocks + in-kernel temporaries."""
    blocks = 2 * (n_q * c * 4 + c * s * key_isz + n_q * s * out_isz)
    temps = 3 * c * s * 4 + 3 * n_q * s * 4
    return blocks + temps + (1 << 20) <= budget_bytes


def _pick_s_tile(s_pad, c, n_aug, n_q, key_isz, out_isz, budget_bytes,
                 max_ts=2048, force_split=False):
    """Largest multiple-of-128 divisor of s_pad whose pipelined footprint
    (double-buffered blocks + in-kernel temporaries) fits the budget.
    Capped at max_ts lanes: HBM bandwidth saturates around 512-1024-lane tiles,
    bigger tiles only burn VMEM/vregs."""
    limit = min(s_pad, max_ts)
    if force_split and s_pad >= 256:
        limit = min(limit, s_pad // 2)      # B == 1: give both TensorCores work
    best = 128
    for ts in range(128, limit + 1, 128):
        if s_pad % ts:
            continue
        blocks = 2 * (n_aug * c * 4 + c * ts * key_isz + n_q * ts * out_isz)
        temps = (2 * c * ts * 4             # f32 cast of key tile + its square
                 + n_aug * c * key_isz      # bf16 cast of augmented query
                 + 2 * n_aug * ts * 4)      # matmul result + scaled output temp
        if blocks + temps + (1 << 20) <= budget_bytes:
            best = ts
    return best


# --------------------------------------------------------------------------
# Kernels
# --------------------------------------------------------------------------

def _make_single_pass_kernel(compute_dtype):
    """grid=(B,): feat read from HBM once.  Mean/centering/normalization are
    folded into reductions of a single raw-dot matmul (q.mean == lane-mean of
    q@f), so there is no centered (C, S) temporary and no in-kernel transpose."""

    def kernel(q_ref, f_ref, o_ref):
        q = q_ref[0]                                      # (NQ, C) raw query cols, f32
        f = f_ref[0]                                      # (C, S)  raw key slab
        ff = f.astype(jnp.float32)
        dot = jnp.dot(q.astype(compute_dtype), f.astype(compute_dtype),
                      preferred_element_type=jnp.float32)          # q.f     (NQ, S)
        mean = jnp.mean(ff, axis=1, keepdims=True)        # spatial mean       (C, 1)
        msq = jnp.sum(mean * mean, keepdims=True)         # ||mean||^2         (1, 1)
        mf = jnp.sum(mean * ff, axis=0, keepdims=True)    # mean.f             (1, S)
        qm = jnp.mean(dot, axis=1, keepdims=True)         # q.mean             (NQ, 1)
        fsq = jnp.sum(ff * ff, axis=0, keepdims=True)     # sum_c f^2          (1, S)
        qsq = jnp.sum(q * q, axis=1, keepdims=True)       # ||q||^2            (NQ, 1)
        # squared norms of the centered vectors; clamp == max(||.||, 1e-12) on the norm
        key_nsq = jnp.maximum(fsq - 2.0 * mf + msq, 1e-24)
        qry_nsq = jnp.maximum(qsq - 2.0 * qm + msq, 1e-24)
        num = dot - mf - qm + msq                         # (q-mean).(f-mean)  (NQ, S)
        o_ref[0] = (num * lax.rsqrt(key_nsq) * lax.rsqrt(qry_nsq)).astype(o_ref.dtype)

    return kernel


def _make_tiled_kernel(n_q, compute_dtype):
    """Streams (C, ts) raw key tiles; the channel mean is row n_q of the
    augmented query so one matmul yields q.f and mean.f, avoiding a centered
    (C, ts) temporary and a lane-width-1 mean block."""

    def kernel(qa_ref, f_ref, o_ref):
        qa = qa_ref[0]                                    # (NA, C) f32, row n_q = mean
        f = f_ref[0]                                      # (C, ts) stream dtype
        dot = jnp.dot(qa.astype(compute_dtype), f.astype(compute_dtype),
                      preferred_element_type=jnp.float32)          # (NA, ts) on MXU
        qf = dot[:n_q, :]                                 # q_hat.f            (NQ, ts)
        mf = dot[n_q:n_q + 1, :]                          # mean.f             (1, ts)
        m = qa[n_q:n_q + 1, :]                            # mean row (f32)     (1, C)
        msq = jnp.sum(m * m, keepdims=True)               # ||mean||^2         (1, 1)
        q_mean = jnp.sum(qa[:n_q, :] * m, axis=1, keepdims=True)   # q_hat.mean (NQ, 1)
        ff = f.astype(jnp.float32)
        fsq = jnp.sum(ff * ff, axis=0, keepdims=True)     # sum_c f^2          (1, ts)
        key_nsq = jnp.maximum(fsq - 2.0 * mf + msq, 1e-24)          # ||f-mean||^2
        o_ref[0] = ((qf - q_mean) * lax.rsqrt(key_nsq)).astype(o_ref.dtype)

    return kernel


# --------------------------------------------------------------------------
# Wrapper
# --------------------------------------------------------------------------

def patch_sim(feat, patch_ids=None, *, patch_nums=256, rng_key=None,
              compute_dtype=jnp.bfloat16, out_dtype=jnp.float32,
              single_pass=None):
    """Pallas forward of PatchSim (norm=True, other=None, full-image-key branch).

    compute_dtype: dtype of the streamed key tiles and MXU operands; statistics,
        eps clamps and rsqrt stay f32.  bf16 (default) halves the dominant HBM
        read; pass jnp.float32 for near-bit-accurate behaviour.
    single_pass: None = auto (single HBM read of feat when the per-batch slab +
        temporaries fit the VMEM budget and B >= 2); True/False to force.
    Returns (patch_sim, patch_ids) like the PyTorch module.
    """
    B, C, W, H = feat.shape
    S = W * H
    feat_flat = feat.reshape(B, C, S)
    feat_f32 = feat_flat.astype(jnp.float32)
    key_stream = feat_flat.astype(compute_dtype)     # no-op if feat already in compute_dtype

    if patch_ids is None:
        # TODO(synk): torch.randperm draws fresh ids every forward; pass a fresh
        # rng_key per call to reproduce that (PRNGKey(0) default is deterministic).
        if rng_key is None:
            rng_key = jax.random.PRNGKey(0)
        perm = jax.random.permutation(rng_key, S)
        patch_ids = perm[: min(patch_nums, S)].astype(jnp.int32)
    num = int(patch_ids.shape[0])
    n_q = max(8, -(-num // 8) * 8)                   # sublane-friendly query row count

    key_isz = jnp.dtype(compute_dtype).itemsize
    out_isz = jnp.dtype(out_dtype).itemsize
    vmem_limit = _vmem_limit_bytes()
    budget = int(vmem_limit * 0.9)

    if single_pass is None:
        single_pass = (B >= 2) and _single_pass_fits(S, C, n_q, key_isz, out_isz, budget)

    cost = pl.CostEstimate(
        flops=2 * B * (n_q + 8) * C * S,
        transcendentals=0,
        bytes_accessed=B * (C * S * key_isz + (n_q + 8) * C * 4 + n_q * S * out_isz),
    )

    if single_pass:
        # ---- single HBM read of feat: whole (C, S) slab per grid step ----
        q_raw = jnp.transpose(jnp.take(feat_f32, patch_ids, axis=2), (0, 2, 1))  # (B, num, C)
        if n_q != num:
            q_raw = jnp.pad(q_raw, ((0, 0), (0, n_q - num), (0, 0)))
        out = pl.pallas_call(
            _make_single_pass_kernel(compute_dtype),
            out_shape=jax.ShapeDtypeStruct((B, n_q, S), out_dtype),
            grid=(B,),
            in_specs=[
                pl.BlockSpec((1, n_q, C), lambda b: (b, 0, 0)),
                pl.BlockSpec((1, C, S), lambda b: (b, 0, 0)),
            ],
            out_specs=pl.BlockSpec((1, n_q, S), lambda b: (b, 0, 0)),
            compiler_params=pltpu.CompilerParams(
                dimension_semantics=("parallel",),
                vmem_limit_bytes=vmem_limit),
            cost_estimate=cost,
        )(q_raw, key_stream)
        return out[:, :num, :], patch_ids

    # ---- tiled two-pass path: wrapper mean prepass + (B, S//ts) pipeline ----
    mean = jnp.mean(feat_f32, axis=2, keepdims=True)                 # (B, C, 1)
    q_c = jnp.take(feat_f32, patch_ids, axis=2) - mean               # (B, C, num)
    q_norm = jnp.sqrt(jnp.sum(q_c * q_c, axis=1, keepdims=True))
    q_hat = jnp.transpose(q_c / jnp.maximum(q_norm, 1e-12), (0, 2, 1))   # (B, num, C)

    # Augmented query: rows [0:num] = q_hat, row n_q = channel mean (mean folded
    # into the matmul; no separate (1, C, 1) mean input, no centered key temp).
    n_aug = n_q + 8
    q_aug = jnp.zeros((B, n_aug, C), jnp.float32)
    q_aug = q_aug.at[:, :num, :].set(q_hat)
    q_aug = q_aug.at[:, n_q, :].set(mean[:, :, 0])

    s_pad = -(-S // 128) * 128
    if s_pad != S:      # lane-align S so every tile pipelines; junk cols sliced off
        key_stream = jnp.pad(key_stream, ((0, 0), (0, 0), (0, s_pad - S)))

    ts = _pick_s_tile(s_pad, C, n_aug, n_q, key_isz, out_isz, budget,
                      force_split=(B == 1))
    grid = (B, s_pad // ts)

    out = pl.pallas_call(
        _make_tiled_kernel(n_q, compute_dtype),
        out_shape=jax.ShapeDtypeStruct((B, n_q, s_pad), out_dtype),
        grid=grid,
        in_specs=[
            pl.BlockSpec((1, n_aug, C), lambda b, s: (b, 0, 0)),
            # TODO(synk): add pipeline_mode=pl.Buffered(3) here if a v7x profile
            # shows exposed DMA at the chosen ts (per-tile compute is tiny).
            pl.BlockSpec((1, C, ts), lambda b, s: (b, 0, s)),
        ],
        out_specs=pl.BlockSpec((1, n_q, ts), lambda b, s: (b, 0, s)),
        compiler_params=pltpu.CompilerParams(
            dimension_semantics=("parallel", "parallel"),
            vmem_limit_bytes=vmem_limit),
        cost_estimate=cost,
    )(q_aug, key_stream)

    return out[:, :num, :S], patch_ids


# --------------------------------------------------------------------------
# Reference + self-test
# --------------------------------------------------------------------------

def _reference(feat, patch_ids):
    """Pure-JAX reference mirroring the PyTorch forward (norm=True, other=None)."""
    B, C, W, H = feat.shape
    x = feat - feat.mean(axis=(-2, -1), keepdims=True)
    n = jnp.sqrt(jnp.sum(x * x, axis=1, keepdims=True))
    xn = x / jnp.maximum(n, 1e-12)                      # F.normalize(dim=1)
    key = xn.reshape(B, C, W * H)
    qry = jnp.transpose(key, (0, 2, 1))[:, patch_ids, :]
    return jnp.einsum("bnc,bcs->bns", qry, key)         # (B, Num, S)


if __name__ == "__main__":
    k_feat, k_ids = jax.random.split(jax.random.PRNGKey(0))
    B, C, W, H = 2, 4, 16, 16
    feat = jax.random.normal(k_feat, (B, C, W, H), dtype=jnp.float32)

    # fixed patch ids shared by every run so all outputs compare to one reference
    ids = jax.random.permutation(k_ids, W * H)[:64].astype(jnp.int32)
    ref = _reference(feat, ids)

    # f32 compute: single-pass slab kernel and tiled kernel (tight tolerance)
    for force in (True, False):
        sim, _ = patch_sim(feat, patch_ids=ids, compute_dtype=jnp.float32,
                           single_pass=force)
        sim = jax.block_until_ready(sim)
        assert sim.shape == ref.shape, (sim.shape, ref.shape)
        err = float(jnp.max(jnp.abs(sim - ref)))
        assert err < 1e-4, ("f32 path", force, err)

    # default performance path (bf16 key stream + MXU operands): loose tolerance
    for force in (True, False):
        sim, _ = patch_sim(feat, patch_ids=ids, single_pass=force)
        sim = jax.block_until_ready(sim)
        assert sim.shape == ref.shape, (sim.shape, ref.shape)
        err = float(jnp.max(jnp.abs(sim - ref)))
        assert err < 5e-2, ("bf16 path", force, err)

    print("KERNEL_OK")
</pallas_src>

<mosaic_0001>
module attributes {stable_mosaic.version = 11 : i64} {
  func.func @kernel(%arg0: i32, %arg1: memref<1x64x4xf32, #tpu.memory_space<vmem>>, %arg2: memref<1x4x256xf32, #tpu.memory_space<vmem>>, %arg3: memref<1x64x256xf32, #tpu.memory_space<vmem>>) attributes {dimension_semantics = [#tpu.dimension_semantics<parallel>], iteration_bounds = array<i64: 2>, scalar_prefetch = 0 : i64, scratch_operands = 0 : i64, tpu.core_type = #tpu.core_type<tc>, window_params = [{transform_indices = @transform_0, window_bounds = array<i64: 1, 64, 4>}, {transform_indices = @transform_1, window_bounds = array<i64: 1, 4, 256>}, {transform_indices = @transform_2, window_bounds = array<i64: 1, 64, 256>}]} {
    %c0 = arith.constant 0 : index
    %c0_0 = arith.constant 0 : index
    %c0_1 = arith.constant 0 : index
    %0 = vector.load %arg1[%c0, %c0_0, %c0_1] : memref<1x64x4xf32, #tpu.memory_space<vmem>>, vector<1x64x4xf32>
    %1 = vector.shape_cast %0 : vector<1x64x4xf32> to vector<64x4xf32>
    %c0_2 = arith.constant 0 : index
    %c0_3 = arith.constant 0 : index
    %c0_4 = arith.constant 0 : index
    %2 = vector.load %arg2[%c0_2, %c0_3, %c0_4] : memref<1x4x256xf32, #tpu.memory_space<vmem>>, vector<1x4x256xf32>
    %3 = vector.shape_cast %2 : vector<1x4x256xf32> to vector<4x256xf32>
    %cst = arith.constant dense<0.000000e+00> : vector<64x256xf32>
    %4 = tpu.matmul %1, %3, %cst {dimension_numbers = #tpu.dot_dimension_numbers<[1], [0], [0], [1], [0, 0, 1, 1], [], []>} : vector<64x4xf32>, vector<4x256xf32>, vector<64x256xf32> -> vector<64x256xf32>
    %cst_5 = arith.constant dense<0.000000e+00> : vector<4xf32>
    %5 = vector.multi_reduction <add>, %3, %cst_5 [1] : vector<4x256xf32> to vector<4xf32>
    %6 = vector.shape_cast %5 : vector<4xf32> to vector<4x1xf32>
    %cst_6 = arith.constant 2.560000e+02 : f32
    %7 = vector.broadcast %cst_6 : f32 to vector<4x1xf32>
    %8 = arith.divf %6, %7 : vector<4x1xf32>
    %9 = arith.mulf %8, %8 : vector<4x1xf32>
    %10 = vector.shape_cast %9 : vector<4x1xf32> to vector<1x4x1xf32>
    %cst_7 = arith.constant dense<0.000000e+00> : vector<1xf32>
    %11 = vector.multi_reduction <add>, %10, %cst_7 [1, 2] : vector<1x4x1xf32> to vector<1xf32>
    %12 = vector.shape_cast %11 : vector<1xf32> to vector<1x1x1xf32>
    %13 = vector.extract %12[0, 0, 0] : f32 from vector<1x1x1xf32>
    %14 = vector.broadcast %13 : f32 to vector<1x1xf32>
    %15 = vector.broadcast %8 : vector<4x1xf32> to vector<4x256xf32>
    %16 = arith.mulf %15, %3 : vector<4x256xf32>
    %cst_8 = arith.constant dense<0.000000e+00> : vector<256xf32>
    %17 = vector.multi_reduction <add>, %16, %cst_8 [0] : vector<4x256xf32> to vector<256xf32>
    %18 = vector.shape_cast %17 : vector<256xf32> to vector<1x256xf32>
    %cst_9 = arith.constant dense<0.000000e+00> : vector<64xf32>
    %19 = vector.multi_reduction <add>, %4, %cst_9 [1] : vector<64x256xf32> to vector<64xf32>
    %20 = vector.shape_cast %19 : vector<64xf32> to vector<64x1xf32>
    %cst_10 = arith.constant 2.560000e+02 : f32
    %21 = vector.broadcast %cst_10 : f32 to vector<64x1xf32>
    %22 = arith.divf %20, %21 : vector<64x1xf32>
    %23 = arith.mulf %3, %3 : vector<4x256xf32>
    %cst_11 = arith.constant dense<0.000000e+00> : vector<256xf32>
    %24 = vector.multi_reduction <add>, %23, %cst_11 [0] : vector<4x256xf32> to vector<256xf32>
    %25 = vector.shape_cast %24 : vector<256xf32> to vector<1x256xf32>
    %26 = arith.mulf %1, %1 : vector<64x4xf32>
    %cst_12 = arith.constant dense<0.000000e+00> : vector<64xf32>
    %27 = vector.multi_reduction <add>, %26, %cst_12 [1] : vector<64x4xf32> to vector<64xf32>
    %28 = vector.shape_cast %27 : vector<64xf32> to vector<64x1xf32>
    %cst_13 = arith.constant 2.000000e+00 : f32
    %29 = vector.broadcast %cst_13 : f32 to vector<1x256xf32>
    %30 = arith.mulf %29, %18 : vector<1x256xf32>
    %31 = arith.subf %25, %30 : vector<1x256xf32>
    %32 = vector.broadcast %14 : vector<1x1xf32> to vector<1x256xf32>
    %33 = arith.addf %31, %32 : vector<1x256xf32>
    %cst_14 = arith.constant 1.000000e-24 : f32
    %34 = vector.broadcast %cst_14 : f32 to vector<1x256xf32>
    %35 = arith.maximumf %33, %34 : vector<1x256xf32>
    %cst_15 = arith.constant 2.000000e+00 : f32
    %36 = vector.broadcast %cst_15 : f32 to vector<64x1xf32>
    %37 = arith.mulf %36, %22 : vector<64x1xf32>
    %38 = arith.subf %28, %37 : vector<64x1xf32>
    %39 = vector.broadcast %14 : vector<1x1xf32> to vector<64x1xf32>
    %40 = arith.addf %38, %39 : vector<64x1xf32>
    %cst_16 = arith.constant 1.000000e-24 : f32
    %41 = vector.broadcast %cst_16 : f32 to vector<64x1xf32>
    %42 = arith.maximumf %40, %41 : vector<64x1xf32>
    %43 = vector.broadcast %18 : vector<1x256xf32> to vector<64x256xf32>
    %44 = arith.subf %4, %43 : vector<64x256xf32>
    %45 = vector.broadcast %22 : vector<64x1xf32> to vector<64x256xf32>
    %46 = arith.subf %44, %45 : vector<64x256xf32>
    %47 = vector.broadcast %14 : vector<1x1xf32> to vector<64x256xf32>
    %48 = arith.addf %46, %47 : vector<64x256xf32>
    %49 = math.rsqrt %35 : vector<1x256xf32>
    %50 = vector.broadcast %49 : vector<1x256xf32> to vector<64x256xf32>
    %51 = arith.mulf %48, %50 : vector<64x256xf32>
    %52 = math.rsqrt %42 : vector<64x1xf32>
    %53 = vector.broadcast %52 : vector<64x1xf32> to vector<64x256xf32>
    %54 = arith.mulf %51, %53 : vector<64x256xf32>
    %c0_17 = arith.constant 0 : index
    %c0_18 = arith.constant 0 : index
    %c0_19 = arith.constant 0 : index
    %55 = vector.load %arg3[%c0_17, %c0_18, %c0_19] : memref<1x64x256xf32, #tpu.memory_space<vmem>>, vector<1x64x256xf32>
    %56 = vector.shape_cast %55 : vector<1x64x256xf32> to vector<64x256xf32>
    %57 = vector.shape_cast %54 : vector<64x256xf32> to vector<1x64x256xf32>
    tpu.vector_store %arg3[%c0_17, %c0_18, %c0_19], %57 {strides = array<i32>} : memref<1x64x256xf32, #tpu.memory_space<vmem>>, vector<1x64x256xf32>,
    return
  }
  func.func @transform_0(%arg0: i32) -> (i32, i32, i32) {
    %c0_i32 = arith.constant 0 : i32
    %c0_i32_0 = arith.constant 0 : i32
    %c0_i32_1 = arith.constant 0 : i32
    return %arg0, %c0_i32, %c0_i32_0 : i32, i32, i32
  }
  func.func @transform_1(%arg0: i32) -> (i32, i32, i32) {
    %c0_i32 = arith.constant 0 : i32
    %c0_i32_0 = arith.constant 0 : i32
    %c0_i32_1 = arith.constant 0 : i32
    return %arg0, %c0_i32, %c0_i32_0 : i32, i32, i32
  }
  func.func @transform_2(%arg0: i32) -> (i32, i32, i32) {
    %c0_i32 = arith.constant 0 : i32
    %c0_i32_0 = arith.constant 0 : i32
    %c0_i32_1 = arith.constant 0 : i32
    return %arg0, %c0_i32, %c0_i32_0 : i32, i32, i32
  }
}

</mosaic_0001>

<llo_original>
// kernel: tpu_custom_call.1
$region0: #{tpu_custom_call.1}
  #allocation0 [shape = 'u32[]', space=smem, size = 0x4, offset = 0x4, fixed_abs, tag = 'smem constant byte address 0x4 - core index']
  #allocation1 [shape = 'u32[144,128]{1,0:T(1,128)}', space=vmem, size = 0x12000, scoped, tag = 'internal scratch']
  %s0 = inlined_call_operand.vmem [shape: f32[2,64,4], index: 0, kind: input, shape index: {}]
  %s1 = inlined_call_operand.vmem [shape: f32[2,4,256], index: 1, kind: input, shape index: {}]
  %s2 = inlined_call_operand.hbm [shape: f32[2,64,256], index: 2, kind: output, shape index: {}]
  %s3 = sld [smem:[#allocation0]]
  $region41: #{tpu_custom_call.1} parent=0
    _
  %s5 = ssub.s32 1, %s3
  %s6 = scalar_select 0, %s5, %s3
  $region1: #{tpu_custom_call.1} parent=0
    #allocation2 [shape = 'u8[131072]{0}', space=vmem, size = 0x20000, scoped, tag = 'output window, operand 0']
    #allocation3 [shape = 's32[2]{0}', space=sflag, size = 0x8, scoped, tag = 'scoped memory for tpu_custom_call.1']
    %7 = vsyncpa [#allocation3], 0
    %s8 = scalar_lea.sflag [#allocation3], 1
    %9 = vsyncpa %s8, 0
    loop: start=0, step=1, limit=4
    $region2: #{tpu_custom_call.1} parent=1 // loop_pre_header
      _
    $region3: #{tpu_custom_call.1} parent=1 // loop_header
      %s11 = sphi 0, %s15
      %p12 = scmp.ge.s32.totalorder %s11, 4
      %s21 = sphi 0, %s23
      %s24 = sphi 0, %s21
      %s25 = sphi 0, %s24
      %s41 = sphi 0, %s25
      %s47 = sphi 0, %s49
      %s50 = sphi 0, %s47
      %s51 = sphi 0, %s50
      %s67 = sphi 0, %s51
      %s73 = sphi 0, %s75
      %s76 = sphi 0, %s73
      %s77 = sphi 0, %s76
      %s93 = sphi 0, %s77
    $region4: #{tpu_custom_call.1} parent=1 // loop_header_branch
      %14 = sbr.rel (%p12) target = $region8
    $region5: #{tpu_custom_call.1} parent=1 // loop_body
      %s16 = ssub.s32 %s11, 1
      %s17 = ssub.s32 %s11, 2
      %s18 = sadd.s32 %s11, 1
      %s19 = ssub.s32 %s11, %s18
      %p20 = scmp.eq.s32.totalorder %s19, 0
      %s22 = sadd.s32 %s21, 1
      %s23 = scalar_select %p20, %s21, %s22
      %p26 = pneg %p20
      %p27 = scmp.eq.s32.totalorder %s11, 1
      %p28 = por %p26, %p27
      %p29 = scmp.ne.s32.totalorder %s21, %s24
      %p30 = scmp.eq.s32.totalorder %s11, 0
      %p31 = por %p29, %p30
      %p32 = scmp.ne.s32.totalorder %s21, %s24
      %p33 = scmp.eq.s32.totalorder %s16, 1
      %p34 = por %p32, %p33
      %p35 = scmp.ne.s32.totalorder %s24, %s25
      %p36 = scmp.eq.s32.totalorder %s16, 0
      %p37 = por %p35, %p36
      %p38 = scmp.ne.s32.totalorder %s24, %s25
      %p39 = scmp.eq.s32.totalorder %s17, 1
      %p40 = por %p38, %p39
      %p42 = scmp.ne.s32.totalorder %s25, %s41
      %p43 = scmp.eq.s32.totalorder %s17, 0
      %p44 = por %p42, %p43
      %s45 = ssub.s32 %s11, %s18
      %p46 = scmp.eq.s32.totalorder %s45, 0
      %s48 = sadd.s32 %s47, 1
      %s49 = scalar_select %p46, %s47, %s48
      %p52 = pneg %p46
      %p53 = scmp.eq.s32.totalorder %s11, 1
      %p54 = por %p52, %p53
      %p55 = scmp.ne.s32.totalorder %s47, %s50
      %p56 = scmp.eq.s32.totalorder %s11, 0
      %p57 = por %p55, %p56
      %p58 = scmp.ne.s32.totalorder %s47, %s50
      %p59 = scmp.eq.s32.totalorder %s16, 1
      %p60 = por %p58, %p59
      %p61 = scmp.ne.s32.totalorder %s50, %s51
      %p62 = scmp.eq.s32.totalorder %s16, 0
      %p63 = por %p61, %p62
      %p64 = scmp.ne.s32.totalorder %s50, %s51
      %p65 = scmp.eq.s32.totalorder %s17, 1
      %p66 = por %p64, %p65
      %p68 = scmp.ne.s32.totalorder %s51, %s67
      %p69 = scmp.eq.s32.totalorder %s17, 0
      %p70 = por %p68, %p69
      %s71 = ssub.s32 %s11, %s18
      %p72 = scmp.eq.s32.totalorder %s71, 0
      %s74 = sadd.s32 %s73, 1
      %s75 = scalar_select %p72, %s73, %s74
      %p78 = pneg %p72
      %p79 = scmp.eq.s32.totalorder %s11, 1
      %p80 = por %p78, %p79
      %p81 = scmp.ne.s32.totalorder %s73, %s76
      %p82 = scmp.eq.s32.totalorder %s11, 0
      %p83 = por %p81, %p82
      %p84 = scmp.ne.s32.totalorder %s73, %s76
      %p85 = scmp.eq.s32.totalorder %s16, 1
      %p86 = por %p84, %p85
      %p87 = scmp.ne.s32.totalorder %s76, %s77
      %p88 = scmp.eq.s32.totalorder %s16, 0
      %p89 = por %p87, %p88
      %p90 = scmp.ne.s32.totalorder %s76, %s77
      %p91 = scmp.eq.s32.totalorder %s17, 1
      %p92 = por %p90, %p91
      %p94 = scmp.ne.s32.totalorder %s77, %s93
      %p95 = scmp.eq.s32.totalorder %s17, 0
      %p96 = por %p94, %p95
      %p97 = scmp.le.s32.totalorder 1, %s11
      %p98 = scmp.lt.s32.totalorder %s11, 3
      %p99 = pnand %p97, %p98
      %p100 = pneg %p99
      // Predicated region
      $region9: #{tpu_custom_call.1} parent=5 // pred_check
        _
      $region10: #{tpu_custom_call.1} parent=5 // pred_check_branch
        %102 = sbr.rel (%p99) target = $region12
      $region11: #{tpu_custom_call.1} parent=5 // pred_region
        %s103 = ssub.s32 %s11, 1
      $region12: #{tpu_custom_call.1} parent=5 // pred_fallthru
        _
      %p104 = scmp.lt.s32.totalorder %s11, 2
      // Predicated region
      $region13: #{tpu_custom_call.1} parent=5 // pred_check
        %p105 = pneg %p104
      $region14: #{tpu_custom_call.1} parent=5 // pred_check_branch
        %107 = sbr.rel (%p105) target = $region16
      $region15: #{tpu_custom_call.1} parent=5 // pred_region
        // Predicated region
        $region17: #{tpu_custom_call.1} parent=15 // pred_check
          %p108 = pneg %p31
        $region18: #{tpu_custom_call.1} parent=15 // pred_check_branch
          %110 = sbr.rel (%p108) target = $region20
        $region19: #{tpu_custom_call.1} parent=15 // pred_region
          %p111 = scmp.lt.s32.totalorder %s11, 1
          %s112 = scalar_select %p111, %s11, 1
          %s113 = smul.addr %s112, 8
          %s114 = smul.addr %s113, 8
          %s115 = scalar_lea.vmem %s0, %s114
        $region20: #{tpu_custom_call.1} parent=15 // pred_fallthru
          _
        // Predicated region
        $region21: #{tpu_custom_call.1} parent=15 // pred_check
          %p116 = pneg %p57
        $region22: #{tpu_custom_call.1} parent=15 // pred_check_branch
          %118 = sbr.rel (%p116) target = $region24
        $region23: #{tpu_custom_call.1} parent=15 // pred_region
          %p119 = scmp.lt.s32.totalorder %s11, 1
          %s120 = scalar_select %p119, %s11, 1
          %s121 = smul.addr %s120, 2
          %s122 = smul.addr %s121, 4
          %s123 = scalar_lea.vmem %s1, %s122
        $region24: #{tpu_custom_call.1} parent=15 // pred_fallthru
          _
      $region16: #{tpu_custom_call.1} parent=5 // pred_fallthru
        _
      %p124 = scmp.le.s32.totalorder 1, %s11
      %p125 = scmp.lt.s32.totalorder %s11, 3
      %p126 = pnand %p124, %p125
      %p127 = pneg %p126
      // Predicated region
      $region25: #{tpu_custom_call.1} parent=5 // pred_check
        _
      $region26: #{tpu_custom_call.1} parent=5 // pred_check_branch
        %129 = sbr.rel (%p126) target = $region28
      $region27: #{tpu_custom_call.1} parent=5 // pred_region
        %s130 = ssub.s32 %s11, 1
        %p131 = scmp.lt.s32.totalorder %s16, 1
        %s132 = scalar_select %p131, %s16, 1
        %s133 = smul.addr %s132, 8
        %s134 = smul.addr %s133, 8
        %s135 = scalar_lea.vmem %s0, %s134
        %p136 = pneg %p37
        %p137 = pneg %p34
        %p138 = scmp.lt.s32.totalorder %s16, 1
        %s139 = scalar_select %p138, %s16, 1
        %s140 = smul.addr %s139, 2
        %s141 = smul.addr %s140, 4
        %s142 = scalar_lea.vmem %s1, %s141
        %p143 = pneg %p63
        %p144 = pneg %p60
        %p145 = pneg %p89
        %p146 = pneg %p86
        %s147 = sand.u32 %s76, 1
        %s148 = scalar_lea.sflag [#allocation3], %s147
        %s149 = sand.u32 %s76, 1
        %s150 = smul.addr %s149, 128
        %s151 = scalar_lea.vmem [#allocation2], %s150
        %p152 = scmp.lt.s32.totalorder %s16, 1
        %s153 = scalar_select %p152, %s16, 1
        %s154 = smul.addr %s153, 8
        %s155 = smul.addr %s154, 8
        %s156 = scalar_lea.vmem %s0, %s155
        %p157 = scmp.lt.s32.totalorder %s16, 1
        %s158 = scalar_select %p157, %s16, 1
        %s159 = smul.addr %s158, 2
        %s160 = smul.addr %s159, 4
        %s161 = scalar_lea.vmem %s1, %s160
        %v162 = vld [vmem:[%s156] sm:$0xff]
        %v163 = vld [vmem:[%s156 + $0x8] sm:$0xff]
        %v164 = vld [vmem:[%s156 + $0x10] sm:$0xff]
        %v165 = vld [vmem:[%s156 + $0x18] sm:$0xff]
        %v166 = vld [vmem:[%s156 + $0x20] sm:$0xff]
        %v167 = vld [vmem:[%s156 + $0x28] sm:$0xff]
        %v168 = vld [vmem:[%s156 + $0x30] sm:$0xff]
        %v169 = vld [vmem:[%s156 + $0x38] sm:$0xff]
        %v170 = vld [vmem:[%s161] sm:$0xff]
        %v172 = vcombine.high %v170, %v170
        %vm173 = vcmask 31744
        %v175 = vsel %vm173, %v162, 0
        %v178 = vsel %vm173, %v163, 0
        %v181 = vsel %vm173, %v164, 0
        %v184 = vsel %vm173, %v165, 0
        %v187 = vsel %vm173, %v166, 0
        %v190 = vsel %vm173, %v167, 0
        %v193 = vsel %vm173, %v168, 0
        %v196 = vsel %vm173, %v169, 0
        %vm198 = vcmask 1043456
        %v199 = vsel %vm198, %v170, 0
        %v201 = vsel %vm198, %v172, 0
        %203 = vmatprep.subr.mxu0 %v201
        %204 = vmatpush1.msra.mxu0 %v199
        %205 = vmatprep.subr.mxu0 0.0
        %206 = vmatpush1.msra.mxu0 0.0
        %207 = vmatprep.subr.mxu0 0.0
        %208 = vmatpush1.msra.mxu0 0.0
        %209 = vmatprep.subr.mxu0 0.0
        %210 = vmatpush1.msra.mxu0 0.0
        %211 = vmatprep.subr.mxu0 0.0
        %212 = vmatpush1.msra.mxu0 0.0
        %213 = vmatprep.subr.mxu0 0.0
        %214 = vmatpush1.msra.mxu0 0.0
        %215 = vmatprep.subr.mxu0 0.0
        %216 = vmatpush1.msra.mxu0 0.0
        %217 = vmatprep.subr.mxu0 0.0
        %218 = vmatpush1.msra.mxu0 0.0
        %219 = vmatprep.subr.mxu0 0.0
        %220 = vmatpush1.msra.mxu0 0.0
        %221 = vmatprep.subr.mxu0 0.0
        %222 = vmatpush1.msra.mxu0 0.0
        %223 = vmatprep.subr.mxu0 0.0
        %224 = vmatpush1.msra.mxu0 0.0
        %225 = vmatprep.subr.mxu0 0.0
        %226 = vmatpush1.msra.mxu0 0.0
        %227 = vmatprep.subr.mxu0 0.0
        %228 = vmatpush1.msra.mxu0 0.0
        %229 = vmatprep.subr.mxu0 0.0
        %230 = vmatpush1.msra.mxu0 0.0
        %231 = vmatprep.subr.mxu0 0.0
        %232 = vmatpush1.msra.mxu0 0.0
        %233 = vmatprep.subr.mxu0 0.0
        %234 = vmatpush1.msra.mxu0 0.0
        %235 = vmatprep.subr.mxu0 0.0
        %236 = vmatpush1.msra.mxu0 0.0
        %237 = vmatprep.subr.mxu0 0.0
        %238 = vmatpush1.msra.mxu0 0.0
        %239 = vmatprep.subr.mxu0 0.0
        %240 = vmatpush1.msra.mxu0 0.0
        %241 = vmatprep.subr.mxu0 0.0
        %242 = vmatpush1.msra.mxu0 0.0
        %243 = vmatprep.subr.mxu0 0.0
        %244 = vmatpush1.msra.mxu0 0.0
        %245 = vmatprep.subr.mxu0 0.0
        %246 = vmatpush1.msra.mxu0 0.0
        %247 = vmatprep.subr.mxu0 0.0
        %248 = vmatpush1.msra.mxu0 0.0
        %249 = vmatprep.subr.mxu0 0.0
        %250 = vmatpush1.msra.mxu0 0.0
        %251 = vmatprep.subr.mxu0 0.0
        %252 = vmatpush1.msra.mxu0 0.0
        %253 = vmatprep.subr.mxu0 0.0
        %254 = vmatpush1.msra.mxu0 0.0
        %255 = vmatprep.subr.mxu0 0.0
        %256 = vmatpush1.msra.mxu0 0.0
        %257 = vmatprep.subr.mxu0 0.0
        %258 = vmatpush1.msra.mxu0 0.0
        %259 = vmatprep.subr.mxu0 0.0
        %260 = vmatpush1.msra.mxu0 0.0
        %261 = vmatprep.subr.mxu0 0.0
        %262 = vmatpush1.msra.mxu0 0.0
        %263 = vmatprep.subr.mxu0 0.0
        %264 = vmatpush1.msra.mxu0 0.0
        %265 = vmatprep.subr.mxu0 0.0
        %266 = vmatpush1.msra.mxu0 0.0
        %267 = vmatprep.mubr.f32.mxu0 0.0
        %268 = vmatmul.mubr.f32.gmra.mrb[0].mxu0 %v175
        %v269 = vpop.f32.mrb[0].mxu0
        %v270 = vadd.f32 0.0, %v269
        %v271 = vpop.f32.mrb[0].mxu0
        %v272 = vadd.f32 0.0, %v271
        %273 = vmatprep.mubr.f32.mxu0 0.0
        %274 = vmatmul.mubr.f32.gmra.mrb[0].mxu0 %v178
        %v275 = vpop.f32.mrb[0].mxu0
        %v276 = vadd.f32 0.0, %v275
        %v277 = vpop.f32.mrb[0].mxu0
        %v278 = vadd.f32 0.0, %v277
        %279 = vmatprep.mubr.f32.mxu0 0.0
        %280 = vmatmul.mubr.f32.gmra.mrb[0].mxu0 %v181
        %v281 = vpop.f32.mrb[0].mxu0
        %v282 = vadd.f32 0.0, %v281
        %v283 = vpop.f32.mrb[0].mxu0
        %v284 = vadd.f32 0.0, %v283
        %285 = vmatprep.mubr.f32.mxu0 0.0
        %286 = vmatmul.mubr.f32.gmra.mrb[0].mxu0 %v184
        %v287 = vpop.f32.mrb[0].mxu0
        %v288 = vadd.f32 0.0, %v287
        %v289 = vpop.f32.mrb[0].mxu0
        %v290 = vadd.f32 0.0, %v289
        %291 = vmatprep.mubr.f32.mxu0 0.0
        %292 = vmatmul.mubr.f32.gmra.mrb[0].mxu0 %v187
        %v293 = vpop.f32.mrb[0].mxu0
        %v294 = vadd.f32 0.0, %v293
        %v295 = vpop.f32.mrb[0].mxu0
        %v296 = vadd.f32 0.0, %v295
        %297 = vmatprep.mubr.f32.mxu0 0.0
        %298 = vmatmul.mubr.f32.gmra.mrb[0].mxu0 %v190
        %v299 = vpop.f32.mrb[0].mxu0
        %v300 = vadd.f32 0.0, %v299
        %v301 = vpop.f32.mrb[0].mxu0
        %v302 = vadd.f32 0.0, %v301
        %303 = vmatprep.mubr.f32.mxu0 0.0
        %304 = vmatmul.mubr.f32.gmra.mrb[0].mxu0 %v193
        %v305 = vpop.f32.mrb[0].mxu0
        %v306 = vadd.f32 0.0, %v305
        %v307 = vpop.f32.mrb[0].mxu0
        %v308 = vadd.f32 0.0, %v307
        %309 = vmatprep.mubr.f32.mxu0 0.0
        %310 = vmatmul.mubr.f32.gmra.mrb[0].mxu0 %v196
        %v311 = vpop.f32.mrb[0].mxu0
        %v312 = vadd.f32 0.0, %v311
        %v313 = vpop.f32.mrb[0].mxu0
        %v314 = vadd.f32 0.0, %v313
        %315 = vdwg.mxu0
        %v317 = vsel %vm198, %v170, 0.0
        %v318 = vsel %vm198, %v172, 0.0
        %v319 = vadd.f32 %v317, %v318
        %320 = vadd.xlane.f32.xlu0 %v319
        %v321 = vpop.xlane.xlu0 %320
        %v322 = vrcp.pop 256.0
        %v323 = vmul.f32 %v321, %v322
        %v324 = vmul.f32 %v323, %v323
        %vm325 = vcmask 3072
        %v326 = vsel %vm325, %v324, 0.0
        %327 = vadd.xlane.f32.xlu0 %v326
        %v328 = vpop.xlane.xlu0 %327
        %v329 = vrot.slane %v328, 4
        %v330 = vadd.f32 %v328, %v329
        %v331 = vrot.slane %v330, 2
        %v332 = vadd.f32 %v330, %v331
        %v333 = vrot.slane %v332, 1
        %v334 = vadd.f32 %v332, %v333
        %s335 = vtos %v334
        %v336 = vmul.f32 %v323, %v170
        %v337 = vmul.f32 %v323, %v172
        %v338 = vsel %vm198, %v336, 0.0
        %v339 = vrot.slane %v338, 4
        %v340 = vadd.f32 %v338, %v339
        %v341 = vrot.slane %v340, 2
        %v342 = vadd.f32 %v340, %v341
        %v343 = vrot.slane %v342, 1
        %v344 = vadd.f32 %v342, %v343
        %v345 = vsel %vm198, %v337, 0.0
        %v346 = vrot.slane %v345, 4
        %v347 = vadd.f32 %v345, %v346
        %v348 = vrot.slane %v347, 2
        %v349 = vadd.f32 %v347, %v348
        %v350 = vrot.slane %v349, 1
        %v351 = vadd.f32 %v349, %v350
        %v352 = vadd.f32 %v270, %v272
        %353 = vadd.xlane.f32.xlu0 %v352
        %v354 = vpop.xlane.xlu0 %353
        %v355 = vadd.f32 %v276, %v278
        %356 = vadd.xlane.f32.xlu0 %v355
        %v357 = vpop.xlane.xlu0 %356
        %v358 = vadd.f32 %v282, %v284
        %359 = vadd.xlane.f32.xlu0 %v358
        %v360 = vpop.xlane.xlu0 %359
        %v361 = vadd.f32 %v288, %v290
        %362 = vadd.xlane.f32.xlu0 %v361
        %v363 = vpop.xlane.xlu0 %362
        %v364 = vadd.f32 %v294, %v296
        %365 = vadd.xlane.f32.xlu0 %v364
        %v366 = vpop.xlane.xlu0 %365
        %v367 = vadd.f32 %v300, %v302
        %368 = vadd.xlane.f32.xlu0 %v367
        %v369 = vpop.xlane.xlu0 %368
        %v370 = vadd.f32 %v306, %v308
        %371 = vadd.xlane.f32.xlu0 %v370
        %v372 = vpop.xlane.xlu0 %371
        %v373 = vadd.f32 %v312, %v314
        %374 = vadd.xlane.f32.xlu0 %v373
        %v375 = vpop.xlane.xlu0 %374
        %v376 = vmul.f32 %v354, %v322
        %v377 = vmul.f32 %v357, %v322
        %v378 = vmul.f32 %v360, %v322
        %v379 = vmul.f32 %v363, %v322
        %v380 = vmul.f32 %v366, %v322
        %v381 = vmul.f32 %v369, %v322
        %v382 = vmul.f32 %v372, %v322
        %v383 = vmul.f32 %v375, %v322
        %v384 = vmul.f32 %v170, %v170
        %v386 = vcombine.high %v384, %v384
        %v388 = vsel %vm198, %v384, 0.0
        %v389 = vrot.slane %v388, 4
        %v390 = vadd.f32 %v388, %v389
        %v391 = vrot.slane %v390, 2
        %v392 = vadd.f32 %v390, %v391
        %v393 = vrot.slane %v392, 1
        %v394 = vadd.f32 %v392, %v393
        %v395 = vsel %vm198, %v386, 0.0
        %v396 = vrot.slane %v395, 4
        %v397 = vadd.f32 %v395, %v396
        %v398 = vrot.slane %v397, 2
        %v399 = vadd.f32 %v397, %v398
        %v400 = vrot.slane %v399, 1
        %v401 = vadd.f32 %v399, %v400
        %v402 = vmul.f32 %v162, %v162
        %v403 = vmul.f32 %v163, %v163
        %v404 = vmul.f32 %v164, %v164
        %v405 = vmul.f32 %v165, %v165
        %v406 = vmul.f32 %v166, %v166
        %v407 = vmul.f32 %v167, %v167
        %v408 = vmul.f32 %v168, %v168
        %v409 = vmul.f32 %v169, %v169
        %v410 = vsel %vm173, %v402, 0.0
        %411 = vadd.xlane.f32.xlu0 %v410
        %v412 = vpop.xlane.xlu0 %411
        %v413 = vsel %vm173, %v403, 0.0
        %414 = vadd.xlane.f32.xlu0 %v413
        %v415 = vpop.xlane.xlu0 %414
        %v416 = vsel %vm173, %v404, 0.0
        %417 = vadd.xlane.f32.xlu0 %v416
        %v418 = vpop.xlane.xlu0 %417
        %v419 = vsel %vm173, %v405, 0.0
        %420 = vadd.xlane.f32.xlu0 %v419
        %v421 = vpop.xlane.xlu0 %420
        %v422 = vsel %vm173, %v406, 0.0
        %423 = vadd.xlane.f32.xlu0 %v422
        %v424 = vpop.xlane.xlu0 %423
        %v425 = vsel %vm173, %v407, 0.0
        %426 = vadd.xlane.f32.xlu0 %v425
        %v427 = vpop.xlane.xlu0 %426
        %v428 = vsel %vm173, %v408, 0.0
        %429 = vadd.xlane.f32.xlu0 %v428
        %v430 = vpop.xlane.xlu0 %429
        %v431 = vsel %vm173, %v409, 0.0
        %432 = vadd.xlane.f32.xlu0 %v431
        %v433 = vpop.xlane.xlu0 %432
        %v434 = vmul.f32 %v344, 2.0
        %v435 = vmul.f32 %v351, 2.0
        %v436 = vsub.f32 %v394, %v434
        %v437 = vsub.f32 %v401, %v435
        %v438 = vstv %s335
        %v439 = vadd.f32 %v436, %v438
        %v440 = vadd.f32 %v437, %v438
        %v441 = vmax.f32 %v439, 1e-24
        %v442 = vmax.f32 %v440, 1e-24
        %v443 = vmul.f32 %v376, 2.0
        %v444 = vmul.f32 %v377, 2.0
        %v445 = vmul.f32 %v378, 2.0
        %v446 = vmul.f32 %v379, 2.0
        %v447 = vmul.f32 %v380, 2.0
        %v448 = vmul.f32 %v381, 2.0
        %v449 = vmul.f32 %v382, 2.0
        %v450 = vmul.f32 %v383, 2.0
        %v451 = vsub.f32 %v412, %v443
        %v452 = vsub.f32 %v415, %v444
        %v453 = vsub.f32 %v418, %v445
        %v454 = vsub.f32 %v421, %v446
        %v455 = vsub.f32 %v424, %v447
        %v456 = vsub.f32 %v427, %v448
        %v457 = vsub.f32 %v430, %v449
        %v458 = vsub.f32 %v433, %v450
        %v459 = vadd.f32 %v451, %v438
        %v460 = vadd.f32 %v452, %v438
        %v461 = vadd.f32 %v453, %v438
        %v462 = vadd.f32 %v454, %v438
        %v463 = vadd.f32 %v455, %v438
        %v464 = vadd.f32 %v456, %v438
        %v465 = vadd.f32 %v457, %v438
        %v466 = vadd.f32 %v458, %v438
        %v467 = vmax.f32 %v459, 1e-24
        %v468 = vmax.f32 %v460, 1e-24
        %v469 = vmax.f32 %v461, 1e-24
        %v470 = vmax.f32 %v462, 1e-24
        %v471 = vmax.f32 %v463, 1e-24
        %v472 = vmax.f32 %v464, 1e-24
        %v473 = vmax.f32 %v465, 1e-24
        %v474 = vmax.f32 %v466, 1e-24
        %v475 = vsub.f32 %v270, %v344
        %v476 = vsub.f32 %v272, %v351
        %v477 = vsub.f32 %v276, %v344
        %v478 = vsub.f32 %v278, %v351
        %v479 = vsub.f32 %v282, %v344
        %v480 = vsub.f32 %v284, %v351
        %v481 = vsub.f32 %v288, %v344
        %v482 = vsub.f32 %v290, %v351
        %v483 = vsub.f32 %v294, %v344
        %v484 = vsub.f32 %v296, %v351
        %v485 = vsub.f32 %v300, %v344
        %v486 = vsub.f32 %v302, %v351
        %v487 = vsub.f32 %v306, %v344
        %v488 = vsub.f32 %v308, %v351
        %v489 = vsub.f32 %v312, %v344
        %v490 = vsub.f32 %v314, %v351
        %v491 = vsub.f32 %v475, %v376
        %v492 = vsub.f32 %v476, %v376
        %v493 = vsub.f32 %v477, %v377
        %v494 = vsub.f32 %v478, %v377
        %v495 = vsub.f32 %v479, %v378
        %v496 = vsub.f32 %v480, %v378
        %v497 = vsub.f32 %v481, %v379
        %v498 = vsub.f32 %v482, %v379
        %v499 = vsub.f32 %v483, %v380
        %v500 = vsub.f32 %v484, %v380
        %v501 = vsub.f32 %v485, %v381
        %v502 = vsub.f32 %v486, %v381
        %v503 = vsub.f32 %v487, %v382
        %v504 = vsub.f32 %v488, %v382
        %v505 = vsub.f32 %v489, %v383
        %v506 = vsub.f32 %v490, %v383
        %v507 = vadd.f32 %v491, %v438
        %v508 = vadd.f32 %v492, %v438
        %v509 = vadd.f32 %v493, %v438
        %v510 = vadd.f32 %v494, %v438
        %v511 = vadd.f32 %v495, %v438
        %v512 = vadd.f32 %v496, %v438
        %v513 = vadd.f32 %v497, %v438
        %v514 = vadd.f32 %v498, %v438
        %v515 = vadd.f32 %v499, %v438
        %v516 = vadd.f32 %v500, %v438
        %v517 = vadd.f32 %v501, %v438
        %v518 = vadd.f32 %v502, %v438
        %v519 = vadd.f32 %v503, %v438
        %v520 = vadd.f32 %v504, %v438
        %v521 = vadd.f32 %v505, %v438
        %v522 = vadd.f32 %v506, %v438
        %v523 = vrsqrt.pop %v441
        %v524 = vrsqrt.pop %v442
        %v525 = vmul.f32 %v507, %v523
        %v526 = vmul.f32 %v508, %v524
        %v527 = vmul.f32 %v509, %v523
        %v528 = vmul.f32 %v510, %v524
        %v529 = vmul.f32 %v511, %v523
        %v530 = vmul.f32 %v512, %v524
        %v531 = vmul.f32 %v513, %v523
        %v532 = vmul.f32 %v514, %v524
        %v533 = vmul.f32 %v515, %v523
        %v534 = vmul.f32 %v516, %v524
        %v535 = vmul.f32 %v517, %v523
        %v536 = vmul.f32 %v518, %v524
        %v537 = vmul.f32 %v519, %v523
        %v538 = vmul.f32 %v520, %v524
        %v539 = vmul.f32 %v521, %v523
        %v540 = vmul.f32 %v522, %v524
        %v541 = vrsqrt.pop %v467
        %v542 = vrsqrt.pop %v468
        %v543 = vrsqrt.pop %v469
        %v544 = vrsqrt.pop %v470
        %v545 = vrsqrt.pop %v471
        %v546 = vrsqrt.pop %v472
        %v547 = vrsqrt.pop %v473
        %v548 = vrsqrt.pop %v474
        %v549 = vmul.f32 %v525, %v541
        %v550 = vmul.f32 %v526, %v541
        %v551 = vmul.f32 %v527, %v542
        %v552 = vmul.f32 %v528, %v542
        %v553 = vmul.f32 %v529, %v543
        %v554 = vmul.f32 %v530, %v543
        %v555 = vmul.f32 %v531, %v544
        %v556 = vmul.f32 %v532, %v544
        %v557 = vmul.f32 %v533, %v545
        %v558 = vmul.f32 %v534, %v545
        %v559 = vmul.f32 %v535, %v546
        %v560 = vmul.f32 %v536, %v546
        %v561 = vmul.f32 %v537, %v547
        %v562 = vmul.f32 %v538, %v547
        %v563 = vmul.f32 %v539, %v548
        %v564 = vmul.f32 %v540, %v548
        %565 = vst [vmem:[%s151] sm:$0xff] %v549
        %566 = vst [vmem:[%s151 + $0x8] sm:$0xff] %v550
        %567 = vst [vmem:[%s151 + $0x10] sm:$0xff] %v551
        %568 = vst [vmem:[%s151 + $0x18] sm:$0xff] %v552
        %569 = vst [vmem:[%s151 + $0x20] sm:$0xff] %v553
        %570 = vst [vmem:[%s151 + $0x28] sm:$0xff] %v554
        %571 = vst [vmem:[%s151 + $0x30] sm:$0xff] %v555
        %572 = vst [vmem:[%s151 + $0x38] sm:$0xff] %v556
        %573 = vst [vmem:[%s151 + $0x40] sm:$0xff] %v557
        %574 = vst [vmem:[%s151 + $0x48] sm:$0xff] %v558
        %575 = vst [vmem:[%s151 + $0x50] sm:$0xff] %v559
        %576 = vst [vmem:[%s151 + $0x58] sm:$0xff] %v560
        %577 = vst [vmem:[%s151 + $0x60] sm:$0xff] %v561
        %578 = vst [vmem:[%s151 + $0x68] sm:$0xff] %v562
        %579 = vst [vmem:[%s151 + $0x70] sm:$0xff] %v563
        %580 = vst [vmem:[%s151 + $0x78] sm:$0xff] %v564
        %s581 = sand.u32 %s76, 1
        %s582 = scalar_lea.sflag [#allocation3], %s581
        %s583 = sand.u32 %s76, 1
        %s584 = smul.addr %s583, 128
        %s585 = scalar_lea.vmem [#allocation2], %s584
        // Predicated region
        $region29: #{tpu_custom_call.1} parent=27 // pred_check
          %p586 = pneg %p86
        $region30: #{tpu_custom_call.1} parent=27 // pred_check_branch
          %588 = sbr.rel (%p586) target = $region32
        $region31: #{tpu_custom_call.1} parent=27 // pred_region
          %s590 = ssub.s32 2048, 2048
          %591 = vsyncadd %s582, %s590
          %s592 = smul.addr %s16, 16
          %s593 = smul.addr %s592, 128
          %s594 = scalar_lea.hbm %s2, %s593
          %s595 = sshll.u32 %s585, 4
          %s596 = int_to_ptr.vmem [resolvable:$true] %s595
          %601 = dma.vmem_to_hbm [thread:$0]  %s596, 2048, %s594, %s582, 256, 256, 16
        $region32: #{tpu_custom_call.1} parent=27 // pred_fallthru
          _
      $region28: #{tpu_custom_call.1} parent=5 // pred_fallthru
        _
      %p602 = scmp.le.s32.totalorder 2, %s11
      // Predicated region
      $region33: #{tpu_custom_call.1} parent=5 // pred_check
        %p603 = pneg %p602
      $region34: #{tpu_custom_call.1} parent=5 // pred_check_branch
        %605 = sbr.rel (%p603) target = $region36
      $region35: #{tpu_custom_call.1} parent=5 // pred_region
        %s606 = ssub.s32 %s11, 2
        // Predicated region
        $region37: #{tpu_custom_call.1} parent=35 // pred_check
          %p607 = pneg %p92
        $region38: #{tpu_custom_call.1} parent=35 // pred_check_branch
          %609 = sbr.rel (%p607) target = $region40
        $region39: #{tpu_custom_call.1} parent=35 // pred_region
          %s610 = sand.u32 %s77, 1
          %s611 = scalar_lea.sflag [#allocation3], %s610
          %s612 = sand.u32 %s77, 1
          %s613 = smul.addr %s612, 128
          %s614 = scalar_lea.vmem [#allocation2], %s613
          %615 = dma.done %s611, 2048
        $region40: #{tpu_custom_call.1} parent=35 // pred_fallthru
          _
      $region36: #{tpu_custom_call.1} parent=5 // pred_fallthru
        _
    $region6: #{tpu_custom_call.1} parent=1 // loop_footer
      %s15 = sadd.s32 1, %s11
    $region7: #{tpu_custom_call.1} parent=1 // loop_footer_branch
      %10 = sbr.rel target = $region3
    $region8: #{tpu_custom_call.1} parent=1 // loop_exit
      _
    %616 = vsyncpa [#allocation3], 1
    %s617 = scalar_lea.sflag [#allocation3], 1
    %618 = vsyncpa %s617, 1

</llo_original>
